<compile_context>
chip_gen: v5e
topology: v5e:2x2
jax: 0.10.0
libtpu: 0.0.40
codegen_flags: <defaults>
</compile_context>

<pallas_src>
import functools

import jax
import jax.numpy as jnp
from jax.experimental import pallas as pl
from jax.experimental.pallas import tpu as pltpu


def _quadratic_kernel(x_ref, w1_ref, b1_ref, w2_ref, b2_ref, o_ref, *, hidden):
    # x_ref / o_ref: (TM, LANES) f32 lane-dense tiles in VMEM.
    # w1_ref / b1_ref / w2_ref: (hidden,) f32 in SMEM; b2_ref: (1,) f32 in SMEM.
    x = x_ref[...]
    acc = None
    for j in range(hidden):  # unrolled: 2*hidden broadcast FMAs + hidden ReLUs (VPU only)
        h = jnp.maximum(x * w1_ref[j] + b1_ref[j], 0.0)
        term = h * w2_ref[j]
        acc = term if acc is None else acc + term
    o_ref[...] = acc + b2_ref[0]


def quadratic_model(x, w1, b1, w2, b2, *, lanes=1024, block_rows=512):
    """Forward pass of QuadraticModel.

    Args:
      x:  (N, 1) float32 (any leading shape with trailing feature dim 1 works)
      w1: (H, 1) float32  -- fc1.weight (PyTorch (out, in) layout), H = 10
      b1: (H,)   float32  -- fc1.bias
      w2: (1, H) float32  -- fc2.weight
      b2: (1,)   float32  -- fc2.bias
    Returns:
      same shape as x, float32
    """
    orig_shape = x.shape
    xf = jnp.asarray(x, jnp.float32).reshape(-1)
    n = xf.shape[0]
    hidden = w1.shape[0]

    # Flatten weights to 1-D so they live in SMEM as plain scalars.
    w1f = jnp.asarray(w1, jnp.float32).reshape(-1)   # (hidden,)
    b1f = jnp.asarray(b1, jnp.float32).reshape(-1)   # (hidden,)
    w2f = jnp.asarray(w2, jnp.float32).reshape(-1)   # (hidden,)
    b2f = jnp.asarray(b2, jnp.float32).reshape(-1)   # (1,)

    # Lane-dense slab: last dim = `lanes` (multiple of 128), row axis is the grid.
    rows = pl.cdiv(n, lanes)
    if rows >= block_rows:
        tm = block_rows                      # divisible by 8
    else:
        tm = max(int(rows), 1)               # full row extent (legal block dim)
    rows_padded = pl.cdiv(rows, tm) * tm
    padded = rows_padded * lanes
    x2d = jnp.pad(xf, (0, padded - n)).reshape(rows_padded, lanes)

    grid = (rows_padded // tm,)
    smem_spec = pl.BlockSpec(memory_space=pltpu.MemorySpace.SMEM)

    y2d = pl.pallas_call(
        functools.partial(_quadratic_kernel, hidden=hidden),
        out_shape=jax.ShapeDtypeStruct((rows_padded, lanes), jnp.float32),
        grid=grid,
        in_specs=[
            pl.BlockSpec((tm, lanes), lambda i: (i, 0)),   # x tile (VMEM, pipelined)
            smem_spec,                                     # w1
            smem_spec,                                     # b1
            smem_spec,                                     # w2
            smem_spec,                                     # b2
        ],
        out_specs=pl.BlockSpec((tm, lanes), lambda i: (i, 0)),
        compiler_params=pltpu.CompilerParams(
            dimension_semantics=("parallel",),
        ),
        cost_estimate=pl.CostEstimate(
            flops=int(padded) * (4 * hidden + 1),
            transcendentals=0,
            bytes_accessed=8 * int(padded),
        ),
    )(x2d, w1f, b1f, w2f, b2f)

    return y2d.reshape(-1)[:n].reshape(orig_shape)


def _ref_forward(x, w1, b1, w2, b2):
    h = jnp.maximum(x @ w1.T + b1, 0.0)
    return h @ w2.T + b2


if __name__ == "__main__":
    key = jax.random.PRNGKey(0)
    kx, k1, k2, k3, k4 = jax.random.split(key, 5)

    # Small batch of scalar inputs, consistent with Linear(1, 10).
    N = 8
    x = jax.random.normal(kx, (N, 1), dtype=jnp.float32)

    # Deterministic parameter init (PyTorch-style uniform bounds).
    bound1 = 1.0  # 1/sqrt(in_features=1)
    w1 = jax.random.uniform(k1, (10, 1), jnp.float32, -bound1, bound1)
    b1 = jax.random.uniform(k2, (10,), jnp.float32, -bound1, bound1)
    bound2 = 1.0 / jnp.sqrt(10.0)
    w2 = jax.random.uniform(k3, (1, 10), jnp.float32, -bound2, bound2)
    b2 = jax.random.uniform(k4, (1,), jnp.float32, -bound2, bound2)

    # Small-shape run (single block).
    y = quadratic_model(x, w1, b1, w2, b2)
    jax.block_until_ready(y)
    y_ref = _ref_forward(x, w1, b1, w2, b2)
    assert y.shape == (N, 1)
    assert jnp.allclose(y, y_ref, atol=1e-5, rtol=1e-5)

    # Exercise the multi-step pipelined grid path with modest shapes.
    N2 = 2048
    x2 = jax.random.normal(kx, (N2, 1), dtype=jnp.float32)
    y2 = quadratic_model(x2, w1, b1, w2, b2, lanes=128, block_rows=8)
    jax.block_until_ready(y2)
    y2_ref = _ref_forward(x2, w1, b1, w2, b2)
    assert jnp.allclose(y2, y2_ref, atol=1e-5, rtol=1e-5)

    print("KERNEL_OK")
</pallas_src>

<mosaic_0001>
module attributes {stable_mosaic.version = 11 : i64} {
  func.func @_quadratic_kernel(%arg0: i32, %arg1: memref<1x1024xf32, #tpu.memory_space<vmem>>, %arg2: memref<10xf32, #tpu.memory_space<smem>>, %arg3: memref<10xf32, #tpu.memory_space<smem>>, %arg4: memref<10xf32, #tpu.memory_space<smem>>, %arg5: memref<1xf32, #tpu.memory_space<smem>>, %arg6: memref<1x1024xf32, #tpu.memory_space<vmem>>) attributes {dimension_semantics = [#tpu.dimension_semantics<parallel>], iteration_bounds = array<i64: 1>, scalar_prefetch = 0 : i64, scratch_operands = 0 : i64, tpu.core_type = #tpu.core_type<tc>, window_params = [{transform_indices = @transform_0, window_bounds = array<i64: 1, 1024>}, {transform_indices = @transform_1, window_bounds = array<i64: 10>}, {transform_indices = @transform_2, window_bounds = array<i64: 10>}, {transform_indices = @transform_3, window_bounds = array<i64: 10>}, {transform_indices = @transform_4, window_bounds = array<i64: 1>}, {transform_indices = @transform_5, window_bounds = array<i64: 1, 1024>}]} {
    %c0 = arith.constant 0 : index
    %c0_0 = arith.constant 0 : index
    %0 = vector.load %arg1[%c0, %c0_0] : memref<1x1024xf32, #tpu.memory_space<vmem>>, vector<1x1024xf32>
    %c0_1 = arith.constant 0 : index
    %1 = memref.load %arg2[%c0_1] : memref<10xf32, #tpu.memory_space<smem>>
    %2 = vector.broadcast %1 : f32 to vector<1x1024xf32>
    %3 = arith.mulf %0, %2 : vector<1x1024xf32>
    %c0_2 = arith.constant 0 : index
    %4 = memref.load %arg3[%c0_2] : memref<10xf32, #tpu.memory_space<smem>>
    %5 = vector.broadcast %4 : f32 to vector<1x1024xf32>
    %6 = arith.addf %3, %5 : vector<1x1024xf32>
    %cst = arith.constant 0.000000e+00 : f32
    %7 = vector.broadcast %cst : f32 to vector<1x1024xf32>
    %8 = arith.maximumf %6, %7 : vector<1x1024xf32>
    %c0_3 = arith.constant 0 : index
    %9 = memref.load %arg4[%c0_3] : memref<10xf32, #tpu.memory_space<smem>>
    %10 = vector.broadcast %9 : f32 to vector<1x1024xf32>
    %11 = arith.mulf %8, %10 : vector<1x1024xf32>
    %c1 = arith.constant 1 : index
    %12 = memref.load %arg2[%c1] : memref<10xf32, #tpu.memory_space<smem>>
    %13 = vector.broadcast %12 : f32 to vector<1x1024xf32>
    %14 = arith.mulf %0, %13 : vector<1x1024xf32>
    %c1_4 = arith.constant 1 : index
    %15 = memref.load %arg3[%c1_4] : memref<10xf32, #tpu.memory_space<smem>>
    %16 = vector.broadcast %15 : f32 to vector<1x1024xf32>
    %17 = arith.addf %14, %16 : vector<1x1024xf32>
    %cst_5 = arith.constant 0.000000e+00 : f32
    %18 = vector.broadcast %cst_5 : f32 to vector<1x1024xf32>
    %19 = arith.maximumf %17, %18 : vector<1x1024xf32>
    %c1_6 = arith.constant 1 : index
    %20 = memref.load %arg4[%c1_6] : memref<10xf32, #tpu.memory_space<smem>>
    %21 = vector.broadcast %20 : f32 to vector<1x1024xf32>
    %22 = arith.mulf %19, %21 : vector<1x1024xf32>
    %23 = arith.addf %11, %22 : vector<1x1024xf32>
    %c2 = arith.constant 2 : index
    %24 = memref.load %arg2[%c2] : memref<10xf32, #tpu.memory_space<smem>>
    %25 = vector.broadcast %24 : f32 to vector<1x1024xf32>
    %26 = arith.mulf %0, %25 : vector<1x1024xf32>
    %c2_7 = arith.constant 2 : index
    %27 = memref.load %arg3[%c2_7] : memref<10xf32, #tpu.memory_space<smem>>
    %28 = vector.broadcast %27 : f32 to vector<1x1024xf32>
    %29 = arith.addf %26, %28 : vector<1x1024xf32>
    %cst_8 = arith.constant 0.000000e+00 : f32
    %30 = vector.broadcast %cst_8 : f32 to vector<1x1024xf32>
    %31 = arith.maximumf %29, %30 : vector<1x1024xf32>
    %c2_9 = arith.constant 2 : index
    %32 = memref.load %arg4[%c2_9] : memref<10xf32, #tpu.memory_space<smem>>
    %33 = vector.broadcast %32 : f32 to vector<1x1024xf32>
    %34 = arith.mulf %31, %33 : vector<1x1024xf32>
    %35 = arith.addf %23, %34 : vector<1x1024xf32>
    %c3 = arith.constant 3 : index
    %36 = memref.load %arg2[%c3] : memref<10xf32, #tpu.memory_space<smem>>
    %37 = vector.broadcast %36 : f32 to vector<1x1024xf32>
    %38 = arith.mulf %0, %37 : vector<1x1024xf32>
    %c3_10 = arith.constant 3 : index
    %39 = memref.load %arg3[%c3_10] : memref<10xf32, #tpu.memory_space<smem>>
    %40 = vector.broadcast %39 : f32 to vector<1x1024xf32>
    %41 = arith.addf %38, %40 : vector<1x1024xf32>
    %cst_11 = arith.constant 0.000000e+00 : f32
    %42 = vector.broadcast %cst_11 : f32 to vector<1x1024xf32>
    %43 = arith.maximumf %41, %42 : vector<1x1024xf32>
    %c3_12 = arith.constant 3 : index
    %44 = memref.load %arg4[%c3_12] : memref<10xf32, #tpu.memory_space<smem>>
    %45 = vector.broadcast %44 : f32 to vector<1x1024xf32>
    %46 = arith.mulf %43, %45 : vector<1x1024xf32>
    %47 = arith.addf %35, %46 : vector<1x1024xf32>
    %c4 = arith.constant 4 : index
    %48 = memref.load %arg2[%c4] : memref<10xf32, #tpu.memory_space<smem>>
    %49 = vector.broadcast %48 : f32 to vector<1x1024xf32>
    %50 = arith.mulf %0, %49 : vector<1x1024xf32>
    %c4_13 = arith.constant 4 : index
    %51 = memref.load %arg3[%c4_13] : memref<10xf32, #tpu.memory_space<smem>>
    %52 = vector.broadcast %51 : f32 to vector<1x1024xf32>
    %53 = arith.addf %50, %52 : vector<1x1024xf32>
    %cst_14 = arith.constant 0.000000e+00 : f32
    %54 = vector.broadcast %cst_14 : f32 to vector<1x1024xf32>
    %55 = arith.maximumf %53, %54 : vector<1x1024xf32>
    %c4_15 = arith.constant 4 : index
    %56 = memref.load %arg4[%c4_15] : memref<10xf32, #tpu.memory_space<smem>>
    %57 = vector.broadcast %56 : f32 to vector<1x1024xf32>
    %58 = arith.mulf %55, %57 : vector<1x1024xf32>
    %59 = arith.addf %47, %58 : vector<1x1024xf32>
    %c5 = arith.constant 5 : index
    %60 = memref.load %arg2[%c5] : memref<10xf32, #tpu.memory_space<smem>>
    %61 = vector.broadcast %60 : f32 to vector<1x1024xf32>
    %62 = arith.mulf %0, %61 : vector<1x1024xf32>
    %c5_16 = arith.constant 5 : index
    %63 = memref.load %arg3[%c5_16] : memref<10xf32, #tpu.memory_space<smem>>
    %64 = vector.broadcast %63 : f32 to vector<1x1024xf32>
    %65 = arith.addf %62, %64 : vector<1x1024xf32>
    %cst_17 = arith.constant 0.000000e+00 : f32
    %66 = vector.broadcast %cst_17 : f32 to vector<1x1024xf32>
    %67 = arith.maximumf %65, %66 : vector<1x1024xf32>
    %c5_18 = arith.constant 5 : index
    %68 = memref.load %arg4[%c5_18] : memref<10xf32, #tpu.memory_space<smem>>
    %69 = vector.broadcast %68 : f32 to vector<1x1024xf32>
    %70 = arith.mulf %67, %69 : vector<1x1024xf32>
    %71 = arith.addf %59, %70 : vector<1x1024xf32>
    %c6 = arith.constant 6 : index
    %72 = memref.load %arg2[%c6] : memref<10xf32, #tpu.memory_space<smem>>
    %73 = vector.broadcast %72 : f32 to vector<1x1024xf32>
    %74 = arith.mulf %0, %73 : vector<1x1024xf32>
    %c6_19 = arith.constant 6 : index
    %75 = memref.load %arg3[%c6_19] : memref<10xf32, #tpu.memory_space<smem>>
    %76 = vector.broadcast %75 : f32 to vector<1x1024xf32>
    %77 = arith.addf %74, %76 : vector<1x1024xf32>
    %cst_20 = arith.constant 0.000000e+00 : f32
    %78 = vector.broadcast %cst_20 : f32 to vector<1x1024xf32>
    %79 = arith.maximumf %77, %78 : vector<1x1024xf32>
    %c6_21 = arith.constant 6 : index
    %80 = memref.load %arg4[%c6_21] : memref<10xf32, #tpu.memory_space<smem>>
    %81 = vector.broadcast %80 : f32 to vector<1x1024xf32>
    %82 = arith.mulf %79, %81 : vector<1x1024xf32>
    %83 = arith.addf %71, %82 : vector<1x1024xf32>
    %c7 = arith.constant 7 : index
    %84 = memref.load %arg2[%c7] : memref<10xf32, #tpu.memory_space<smem>>
    %85 = vector.broadcast %84 : f32 to vector<1x1024xf32>
    %86 = arith.mulf %0, %85 : vector<1x1024xf32>
    %c7_22 = arith.constant 7 : index
    %87 = memref.load %arg3[%c7_22] : memref<10xf32, #tpu.memory_space<smem>>
    %88 = vector.broadcast %87 : f32 to vector<1x1024xf32>
    %89 = arith.addf %86, %88 : vector<1x1024xf32>
    %cst_23 = arith.constant 0.000000e+00 : f32
    %90 = vector.broadcast %cst_23 : f32 to vector<1x1024xf32>
    %91 = arith.maximumf %89, %90 : vector<1x1024xf32>
    %c7_24 = arith.constant 7 : index
    %92 = memref.load %arg4[%c7_24] : memref<10xf32, #tpu.memory_space<smem>>
    %93 = vector.broadcast %92 : f32 to vector<1x1024xf32>
    %94 = arith.mulf %91, %93 : vector<1x1024xf32>
    %95 = arith.addf %83, %94 : vector<1x1024xf32>
    %c8 = arith.constant 8 : index
    %96 = memref.load %arg2[%c8] : memref<10xf32, #tpu.memory_space<smem>>
    %97 = vector.broadcast %96 : f32 to vector<1x1024xf32>
    %98 = arith.mulf %0, %97 : vector<1x1024xf32>
    %c8_25 = arith.constant 8 : index
    %99 = memref.load %arg3[%c8_25] : memref<10xf32, #tpu.memory_space<smem>>
    %100 = vector.broadcast %99 : f32 to vector<1x1024xf32>
    %101 = arith.addf %98, %100 : vector<1x1024xf32>
    %cst_26 = arith.constant 0.000000e+00 : f32
    %102 = vector.broadcast %cst_26 : f32 to vector<1x1024xf32>
    %103 = arith.maximumf %101, %102 : vector<1x1024xf32>
    %c8_27 = arith.constant 8 : index
    %104 = memref.load %arg4[%c8_27] : memref<10xf32, #tpu.memory_space<smem>>
    %105 = vector.broadcast %104 : f32 to vector<1x1024xf32>
    %106 = arith.mulf %103, %105 : vector<1x1024xf32>
    %107 = arith.addf %95, %106 : vector<1x1024xf32>
    %c9 = arith.constant 9 : index
    %108 = memref.load %arg2[%c9] : memref<10xf32, #tpu.memory_space<smem>>
    %109 = vector.broadcast %108 : f32 to vector<1x1024xf32>
    %110 = arith.mulf %0, %109 : vector<1x1024xf32>
    %c9_28 = arith.constant 9 : index
    %111 = memref.load %arg3[%c9_28] : memref<10xf32, #tpu.memory_space<smem>>
    %112 = vector.broadcast %111 : f32 to vector<1x1024xf32>
    %113 = arith.addf %110, %112 : vector<1x1024xf32>
    %cst_29 = arith.constant 0.000000e+00 : f32
    %114 = vector.broadcast %cst_29 : f32 to vector<1x1024xf32>
    %115 = arith.maximumf %113, %114 : vector<1x1024xf32>
    %c9_30 = arith.constant 9 : index
    %116 = memref.load %arg4[%c9_30] : memref<10xf32, #tpu.memory_space<smem>>
    %117 = vector.broadcast %116 : f32 to vector<1x1024xf32>
    %118 = arith.mulf %115, %117 : vector<1x1024xf32>
    %119 = arith.addf %107, %118 : vector<1x1024xf32>
    %c0_31 = arith.constant 0 : index
    %120 = memref.load %arg5[%c0_31] : memref<1xf32, #tpu.memory_space<smem>>
    %121 = vector.broadcast %120 : f32 to vector<1x1024xf32>
    %122 = arith.addf %119, %121 : vector<1x1024xf32>
    %c0_32 = arith.constant 0 : index
    %c0_33 = arith.constant 0 : index
    %123 = vector.load %arg6[%c0_32, %c0_33] : memref<1x1024xf32, #tpu.memory_space<vmem>>, vector<1x1024xf32>
    tpu.vector_store %arg6[%c0_32, %c0_33], %122 {strides = array<i32>} : memref<1x1024xf32, #tpu.memory_space<vmem>>, vector<1x1024xf32>,
    return
  }
  func.func @transform_0(%arg0: i32) -> (i32, i32) {
    %c0_i32 = arith.constant 0 : i32
    %c0_i32_0 = arith.constant 0 : i32
    return %arg0, %c0_i32 : i32, i32
  }
  func.func @transform_1(%arg0: i32) -> i32 {
    %c0_i32 = arith.constant 0 : i32
    %c0_i32_0 = arith.constant 0 : i32
    return %c0_i32 : i32
  }
  func.func @transform_2(%arg0: i32) -> i32 {
    %c0_i32 = arith.constant 0 : i32
    %c0_i32_0 = arith.constant 0 : i32
    return %c0_i32 : i32
  }
  func.func @transform_3(%arg0: i32) -> i32 {
    %c0_i32 = arith.constant 0 : i32
    %c0_i32_0 = arith.constant 0 : i32
    return %c0_i32 : i32
  }
  func.func @transform_4(%arg0: i32) -> i32 {
    %c0_i32 = arith.constant 0 : i32
    %c0_i32_0 = arith.constant 0 : i32
    return %c0_i32 : i32
  }
  func.func @transform_5(%arg0: i32) -> (i32, i32) {
    %c0_i32 = arith.constant 0 : i32
    %c0_i32_0 = arith.constant 0 : i32
    return %arg0, %c0_i32 : i32, i32
  }
}

</mosaic_0001>

<llo_original>
// kernel: tpu_custom_call.1
$region0: #{tpu_custom_call.1}
  #allocation0 [shape = 'u32[]', space=smem, size = 0x4, offset = 0x4, fixed_abs, tag = 'smem constant byte address 0x4 - core index']
  #allocation1 [shape = 'u32[72,128]{1,0:T(1,128)}', space=vmem, size = 0x9000, scoped, tag = 'internal scratch']
  #allocation2 [shape = 'f32[1]{0:T(128)S(6)}', space=smem, size = 0x200, scoped, tag = 'scoped memory for tpu_custom_call.1']
  %s0 = inlined_call_operand.hbm [shape: f32[1,1024], index: 0, kind: input, shape index: {}]
  %s1 = inlined_call_operand.vmem [shape: f32[10], index: 1, kind: input, shape index: {}]
  %s2 = inlined_call_operand.vmem [shape: f32[10], index: 2, kind: input, shape index: {}]
  %s3 = inlined_call_operand.vmem [shape: f32[10], index: 3, kind: input, shape index: {}]
  %s4 = inlined_call_operand.<no memory space> [shape: f32[1], index: 4, kind: input, shape index: {}]
  %s5 = inlined_call_operand.hbm [shape: f32[1,1024], index: 5, kind: output, shape index: {}]
  %s6 = sld [smem:[#allocation0]]
  $region46: #{tpu_custom_call.1} parent=0
    _
  %s8 = ssub.s32 1, %s6
  %s9 = scalar_select 0, %s8, %s6
  %10 = sst [smem:[#allocation2]] %s4
  $region1: #{tpu_custom_call.1} parent=0
    #allocation3 [shape = 'u8[4096]{0}', space=vmem, size = 0x1000, scoped, tag = 'input window, operand 0, single buffered']
    #allocation4 [shape = 's32[1]{0}', space=sflag, size = 0x4, scoped, tag = 'scoped memory for tpu_custom_call.1']
    #allocation5 [shape = 's32[1]{0}', space=sflag, size = 0x4, scoped, tag = 'scoped memory for tpu_custom_call.1']
    #allocation6 [shape = 's32[1]{0}', space=sflag, size = 0x4, scoped, tag = 'scoped memory for tpu_custom_call.1']
    #allocation7 [shape = 'u8[512]{0}', space=smem, size = 0x200, scoped, tag = 'input window, operand 1, single buffered']
    #allocation8 [shape = 'u8[512]{0}', space=smem, size = 0x200, scoped, tag = 'input window, operand 2, single buffered']
    #allocation9 [shape = 's32[1]{0}', space=sflag, size = 0x4, scoped, tag = 'scoped memory for tpu_custom_call.1']
    #allocation10 [shape = 'u8[512]{0}', space=smem, size = 0x200, scoped, tag = 'input window, operand 3, single buffered']
    #allocation11 [shape = 'u8[4096]{0}', space=vmem, size = 0x1000, scoped, tag = 'output window, operand 0, single buffered']
    %11 = vsyncpa [#allocation4], 0
    %12 = vsyncpa [#allocation6], 0
    %13 = vsyncpa [#allocation9], 0
    %14 = vsyncpa [#allocation5], 0
    // Predicated region
    $region2: #{tpu_custom_call.1} parent=1 // pred_check
      _
    $region3: #{tpu_custom_call.1} parent=1 // pred_check_branch
      %16 = sbr.rel (0) target = $region5
    $region4: #{tpu_custom_call.1} parent=1 // pred_region
      %18 = vsyncadd [#allocation4], 0
      %s20 = sshll.u32 %s0, 4
      %s21 = int_to_ptr.hbm [resolvable:$true] %s20
      %s22 = sshll.u32 [#allocation3], 4
      %s23 = int_to_ptr.vmem [resolvable:$true] %s22
      %25 = dma.hbm_to_vmem [thread:$0]  %s21, 128, %s23, [#allocation4]
    $region5: #{tpu_custom_call.1} parent=1 // pred_fallthru
      _
    // Predicated region
    $region6: #{tpu_custom_call.1} parent=1 // pred_check
      _
    $region7: #{tpu_custom_call.1} parent=1 // pred_check_branch
      %27 = sbr.rel (0) target = $region9
    $region8: #{tpu_custom_call.1} parent=1 // pred_region
      %29 = vsyncadd [#allocation6], 0
      %s31 = sshll.u32 %s1, 4
      %s32 = int_to_ptr.vmem [resolvable:$true] %s31
      %34 = dma.vmem_to_smem %s32, 16, [#allocation7], [#allocation6]
    $region9: #{tpu_custom_call.1} parent=1 // pred_fallthru
      _
    // Predicated region
    $region10: #{tpu_custom_call.1} parent=1 // pred_check
      _
    $region11: #{tpu_custom_call.1} parent=1 // pred_check_branch
      %36 = sbr.rel (0) target = $region13
    $region12: #{tpu_custom_call.1} parent=1 // pred_region
      %38 = vsyncadd [#allocation9], 0
      %s40 = sshll.u32 %s2, 4
      %s41 = int_to_ptr.vmem [resolvable:$true] %s40
      %43 = dma.vmem_to_smem %s41, 16, [#allocation8], [#allocation9]
    $region13: #{tpu_custom_call.1} parent=1 // pred_fallthru
      _
    // Predicated region
    $region14: #{tpu_custom_call.1} parent=1 // pred_check
      _
    $region15: #{tpu_custom_call.1} parent=1 // pred_check_branch
      %45 = sbr.rel (0) target = $region17
    $region16: #{tpu_custom_call.1} parent=1 // pred_region
      %47 = vsyncadd [#allocation9], 0
      %s49 = sshll.u32 %s3, 4
      %s50 = int_to_ptr.vmem [resolvable:$true] %s49
      %52 = dma.vmem_to_smem %s50, 16, [#allocation10], [#allocation9]
    $region17: #{tpu_custom_call.1} parent=1 // pred_fallthru
      _
    // Predicated region
    $region18: #{tpu_custom_call.1} parent=1 // pred_check
      _
    $region19: #{tpu_custom_call.1} parent=1 // pred_check_branch
      %54 = sbr.rel (0) target = $region21
    $region20: #{tpu_custom_call.1} parent=1 // pred_region
      _
    $region21: #{tpu_custom_call.1} parent=1 // pred_fallthru
      _
    // Predicated region
    $region22: #{tpu_custom_call.1} parent=1 // pred_check
      _
    $region23: #{tpu_custom_call.1} parent=1 // pred_check_branch
      %56 = sbr.rel (0) target = $region25
    $region24: #{tpu_custom_call.1} parent=1 // pred_region
      %58 = dma.done [#allocation4], 128
    $region25: #{tpu_custom_call.1} parent=1 // pred_fallthru
      _
    // Predicated region
    $region26: #{tpu_custom_call.1} parent=1 // pred_check
      _
    $region27: #{tpu_custom_call.1} parent=1 // pred_check_branch
      %60 = sbr.rel (0) target = $region29
    $region28: #{tpu_custom_call.1} parent=1 // pred_region
      %62 = dma.done [#allocation6], 16
    $region29: #{tpu_custom_call.1} parent=1 // pred_fallthru
      _
    // Predicated region
    $region30: #{tpu_custom_call.1} parent=1 // pred_check
      _
    $region31: #{tpu_custom_call.1} parent=1 // pred_check_branch
      %64 = sbr.rel (0) target = $region33
    $region32: #{tpu_custom_call.1} parent=1 // pred_region
      %66 = dma.done [#allocation9], 16
    $region33: #{tpu_custom_call.1} parent=1 // pred_fallthru
      _
    // Predicated region
    $region34: #{tpu_custom_call.1} parent=1 // pred_check
      _
    $region35: #{tpu_custom_call.1} parent=1 // pred_check_branch
      %68 = sbr.rel (0) target = $region37
    $region36: #{tpu_custom_call.1} parent=1 // pred_region
      %70 = dma.done [#allocation9], 16
    $region37: #{tpu_custom_call.1} parent=1 // pred_fallthru
      _
    %71 = sfence
    %v72 = vld [vmem:[#allocation3] sm:$0xff]
    %s73 = sld [smem:[#allocation7]]
    %v74 = vstv %s73
    %v75 = vmul.f32 %v72, %v74
    %s76 = sld [smem:[#allocation8]]
    %v77 = vstv %s76
    %v78 = vadd.f32 %v75, %v77
    %v79 = vmax.f32 %v78, 0.0
    %s80 = sld [smem:[#allocation10]]
    %v81 = vstv %s80
    %v82 = vmul.f32 %v79, %v81
    %s83 = sld [smem:[#allocation7 + $0x1]]
    %v84 = vstv %s83
    %v85 = vmul.f32 %v72, %v84
    %s86 = sld [smem:[#allocation8 + $0x1]]
    %v87 = vstv %s86
    %v88 = vadd.f32 %v85, %v87
    %v89 = vmax.f32 %v88, 0.0
    %s90 = sld [smem:[#allocation10 + $0x1]]
    %v91 = vstv %s90
    %v92 = vmul.f32 %v89, %v91
    %v93 = vadd.f32 %v82, %v92
    %s94 = sld [smem:[#allocation7 + $0x2]]
    %v95 = vstv %s94
    %v96 = vmul.f32 %v72, %v95
    %s97 = sld [smem:[#allocation8 + $0x2]]
    %v98 = vstv %s97
    %v99 = vadd.f32 %v96, %v98
    %v100 = vmax.f32 %v99, 0.0
    %s101 = sld [smem:[#allocation10 + $0x2]]
    %v102 = vstv %s101
    %v103 = vmul.f32 %v100, %v102
    %v104 = vadd.f32 %v93, %v103
    %s105 = sld [smem:[#allocation7 + $0x3]]
    %v106 = vstv %s105
    %v107 = vmul.f32 %v72, %v106
    %s108 = sld [smem:[#allocation8 + $0x3]]
    %v109 = vstv %s108
    %v110 = vadd.f32 %v107, %v109
    %v111 = vmax.f32 %v110, 0.0
    %s112 = sld [smem:[#allocation10 + $0x3]]
    %v113 = vstv %s112
    %v114 = vmul.f32 %v111, %v113
    %v115 = vadd.f32 %v104, %v114
    %s116 = sld [smem:[#allocation7 + $0x4]]
    %v117 = vstv %s116
    %v118 = vmul.f32 %v72, %v117
    %s119 = sld [smem:[#allocation8 + $0x4]]
    %v120 = vstv %s119
    %v121 = vadd.f32 %v118, %v120
    %v122 = vmax.f32 %v121, 0.0
    %s123 = sld [smem:[#allocation10 + $0x4]]
    %v124 = vstv %s123
    %v125 = vmul.f32 %v122, %v124
    %v126 = vadd.f32 %v115, %v125
    %s127 = sld [smem:[#allocation7 + $0x5]]
    %v128 = vstv %s127
    %v129 = vmul.f32 %v72, %v128
    %s130 = sld [smem:[#allocation8 + $0x5]]
    %v131 = vstv %s130
    %v132 = vadd.f32 %v129, %v131
    %v133 = vmax.f32 %v132, 0.0
    %s134 = sld [smem:[#allocation10 + $0x5]]
    %v135 = vstv %s134
    %v136 = vmul.f32 %v133, %v135
    %v137 = vadd.f32 %v126, %v136
    %s138 = sld [smem:[#allocation7 + $0x6]]
    %v139 = vstv %s138
    %v140 = vmul.f32 %v72, %v139
    %s141 = sld [smem:[#allocation8 + $0x6]]
    %v142 = vstv %s141
    %v143 = vadd.f32 %v140, %v142
    %v144 = vmax.f32 %v143, 0.0
    %s145 = sld [smem:[#allocation10 + $0x6]]
    %v146 = vstv %s145
    %v147 = vmul.f32 %v144, %v146
    %v148 = vadd.f32 %v137, %v147
    %s149 = sld [smem:[#allocation7 + $0x7]]
    %v150 = vstv %s149
    %v151 = vmul.f32 %v72, %v150
    %s152 = sld [smem:[#allocation8 + $0x7]]
    %v153 = vstv %s152
    %v154 = vadd.f32 %v151, %v153
    %v155 = vmax.f32 %v154, 0.0
    %s156 = sld [smem:[#allocation10 + $0x7]]
    %v157 = vstv %s156
    %v158 = vmul.f32 %v155, %v157
    %v159 = vadd.f32 %v148, %v158
    %s160 = sld [smem:[#allocation7 + $0x8]]
    %v161 = vstv %s160
    %v162 = vmul.f32 %v72, %v161
    %s163 = sld [smem:[#allocation8 + $0x8]]
    %v164 = vstv %s163
    %v165 = vadd.f32 %v162, %v164
    %v166 = vmax.f32 %v165, 0.0
    %s167 = sld [smem:[#allocation10 + $0x8]]
    %v168 = vstv %s167
    %v169 = vmul.f32 %v166, %v168
    %v170 = vadd.f32 %v159, %v169
    %s171 = sld [smem:[#allocation7 + $0x9]]
    %v172 = vstv %s171
    %v173 = vmul.f32 %v72, %v172
    %s174 = sld [smem:[#allocation8 + $0x9]]
    %v175 = vstv %s174
    %v176 = vadd.f32 %v173, %v175
    %v177 = vmax.f32 %v176, 0.0
    %s178 = sld [smem:[#allocation10 + $0x9]]
    %v179 = vstv %s178
    %v180 = vmul.f32 %v177, %v179
    %v181 = vadd.f32 %v170, %v180
    %s182 = sld [smem:[#allocation2]]
    %v183 = vstv %s182
    %v184 = vadd.f32 %v181, %v183
    %185 = vst [vmem:[#allocation11] sm:$0xff] %v184
    // Predicated region
    $region38: #{tpu_custom_call.1} parent=1 // pred_check
      _
    $region39: #{tpu_custom_call.1} parent=1 // pred_check_branch
      %187 = sbr.rel (0) target = $region41
    $region40: #{tpu_custom_call.1} parent=1 // pred_region
      %189 = vsyncadd [#allocation5], 0
      %s191 = sshll.u32 [#allocation11], 4
      %s192 = int_to_ptr.vmem [resolvable:$true] %s191
      %s193 = sshll.u32 %s5, 4
      %s194 = int_to_ptr.hbm [resolvable:$true] %s193
      %196 = dma.vmem_to_hbm [thread:$0]  %s192, 128, %s194, [#allocation5]
    $region41: #{tpu_custom_call.1} parent=1 // pred_fallthru
      _
    // Predicated region
    $region42: #{tpu_custom_call.1} parent=1 // pred_check
      _
    $region43: #{tpu_custom_call.1} parent=1 // pred_check_branch
      %198 = sbr.rel (0) target = $region45
    $region44: #{tpu_custom_call.1} parent=1 // pred_region
      %200 = dma.done [#allocation5], 128
    $region45: #{tpu_custom_call.1} parent=1 // pred_fallthru
      _
    %201 = vsyncpa [#allocation4], 1
    %202 = vsyncpa [#allocation5], 1
    %203 = vsyncpa [#allocation6], 1
    %204 = vsyncpa [#allocation9], 1

</llo_original>
